<compile_context>
chip_gen: v7x
topology: tpu7x:2x2x1
jax: 0.10.0
libtpu: 0.0.40
codegen_flags: <defaults>
</compile_context>

<pallas_src>
import math
from functools import partial

import jax
import jax.numpy as jnp
from jax import lax
from jax.experimental import pallas as pl
from jax.experimental.pallas import tpu as pltpu


# ----------------------------------------------------------------------------- helpers

def _pick_tile(dim: int, cap: int, align: int) -> int:
    """Largest tile <= cap that exactly divides `dim` (multiple of `align` if possible)."""
    if dim <= cap:
        return dim
    t = (cap // align) * align
    while t >= align:
        if dim % t == 0:
            return t
        t -= align
    return dim  # fall back to a single full-dim block


def make_positional_encoding(d_model: int, max_len: int = 6400) -> jnp.ndarray:
    """pe buffer, shape [max_len, 1, d_model], matching the torch sin/cos init."""
    position = jnp.arange(max_len, dtype=jnp.float32)[:, None]
    div_term = jnp.exp(
        jnp.arange(0, d_model, 2, dtype=jnp.float32) * (-math.log(10000.0) / d_model)
    )
    ang = position * div_term
    pe = jnp.zeros((max_len, d_model), dtype=jnp.float32)
    pe = pe.at[:, 0::2].set(jnp.sin(ang))
    pe = pe.at[:, 1::2].set(jnp.cos(ang))
    return pe[:, None, :]


# ------------------------------------------------- kernel 1: fused emb-scale + PE add

def _scale_pe_kernel(x_ref, pe_ref, o_ref, *, scale):
    # x_ref: (s_tile, D)   pe_ref: (1, D)   o_ref: (s_tile, D)
    o_ref[...] = x_ref[...] * scale + pe_ref[...]


def scale_add_pe(x: jnp.ndarray, pe3: jnp.ndarray, scale: float) -> jnp.ndarray:
    """out[b, s, :] = x[b, s, :] * scale + pe3[b, 0, :].   x: [B,S,D], pe3: [B,1,D]."""
    B, S, D = x.shape
    pe3 = pe3.astype(x.dtype)                      # keep the add in x.dtype (feedback)
    bytes_per_row = D * x.dtype.itemsize
    cap = max(8, min(512, (4 << 20) // max(bytes_per_row, 1)))   # ~4 MiB / block
    s_tile = _pick_tile(S, cap, 8)
    return pl.pallas_call(
        partial(_scale_pe_kernel, scale=scale),
        out_shape=jax.ShapeDtypeStruct((B, S, D), x.dtype),
        grid=(B, S // s_tile),
        in_specs=[
            pl.BlockSpec((None, s_tile, D), lambda b, s: (b, s, 0)),   # kernel sees (s_tile, D)
            pl.BlockSpec((None, 1, D), lambda b, s: (b, 0, 0)),        # kernel sees (1, D)
        ],
        out_specs=pl.BlockSpec((None, s_tile, D), lambda b, s: (b, s, 0)),
        compiler_params=pltpu.CompilerParams(
            dimension_semantics=("parallel", "parallel")),
    )(x, pe3)


# ------------------------------------------------- kernel 2: tiled linear (+bias, +gelu)

def _linear_kernel(x_ref, w_ref, b_ref, o_ref, acc_ref, *, activation):
    @pl.when(pl.program_id(2) == 0)
    def _():
        acc_ref[...] = jnp.zeros_like(acc_ref)

    acc_ref[...] += jnp.dot(x_ref[...], w_ref[...],
                            preferred_element_type=jnp.float32)

    @pl.when(pl.program_id(2) == pl.num_programs(2) - 1)
    def _():
        out = acc_ref[...] + b_ref[...]
        if activation == "gelu":
            out = jax.nn.gelu(out, approximate=True)
        o_ref[...] = out.astype(o_ref.dtype)


def linear(x2d: jnp.ndarray, w: jnp.ndarray, b: jnp.ndarray, *, activation=None) -> jnp.ndarray:
    """x2d: [M, K] @ w: [K, N] + b: [N]  (optionally followed by GELU)."""
    M, K = x2d.shape
    _, N = w.shape
    tm = _pick_tile(M, 256, 8)
    tn = _pick_tile(N, 512, 128)
    tk = _pick_tile(K, 512, 128)
    return pl.pallas_call(
        partial(_linear_kernel, activation=activation),
        out_shape=jax.ShapeDtypeStruct((M, N), x2d.dtype),
        grid=(M // tm, N // tn, K // tk),
        in_specs=[
            pl.BlockSpec((tm, tk), lambda i, j, k: (i, k)),
            pl.BlockSpec((tk, tn), lambda i, j, k: (k, j)),
            pl.BlockSpec((1, tn), lambda i, j, k: (0, j)),
        ],
        out_specs=pl.BlockSpec((tm, tn), lambda i, j, k: (i, j)),
        scratch_shapes=[pltpu.VMEM((tm, tn), jnp.float32)],
        compiler_params=pltpu.CompilerParams(
            dimension_semantics=("parallel", "parallel", "arbitrary")),
    )(x2d, w, b.reshape(1, N))


# ------------------------------------------------- kernel 3: per-(batch*head) attention

def _attn_kernel(q_ref, k_ref, v_ref, o_ref, *, scale):
    # TODO(synk): holds the full SxS score tile; use a flash-style KV grid for long S.
    q = q_ref[...] * scale                                             # (S, hd)
    s = jnp.einsum("qd,kd->qk", q, k_ref[...],
                   preferred_element_type=jnp.float32)                 # (S, S)
    m = jnp.max(s, axis=-1, keepdims=True)
    p = jnp.exp(s - m)
    p = p / jnp.sum(p, axis=-1, keepdims=True)
    o_ref[...] = jnp.einsum("qk,kd->qd", p.astype(v_ref.dtype), v_ref[...],
                            preferred_element_type=jnp.float32).astype(o_ref.dtype)


def attention(q: jnp.ndarray, k: jnp.ndarray, v: jnp.ndarray) -> jnp.ndarray:
    """q, k, v: [B, H, S, hd] -> [B, H, S, hd]."""
    B, H, S, hd = q.shape
    scale = 1.0 / math.sqrt(hd)
    qf, kf, vf = (t.reshape(B * H, S, hd) for t in (q, k, v))
    spec = pl.BlockSpec((None, S, hd), lambda i: (i, 0, 0))            # kernel sees (S, hd)
    out = pl.pallas_call(
        partial(_attn_kernel, scale=scale),
        out_shape=jax.ShapeDtypeStruct((B * H, S, hd), q.dtype),
        grid=(B * H,),
        in_specs=[spec, spec, spec],
        out_specs=spec,
        compiler_params=pltpu.CompilerParams(dimension_semantics=("parallel",)),
    )(qf, kf, vf)
    return out.reshape(B, H, S, hd)


# ------------------------------------------------- kernel 4: residual add + LayerNorm

def _add_ln_kernel(x_ref, r_ref, g_ref, b_ref, o_ref, *, eps):
    h = x_ref[...] + r_ref[...]
    mu = jnp.mean(h, axis=-1, keepdims=True)
    c = h - mu
    var = jnp.mean(c * c, axis=-1, keepdims=True)
    o_ref[...] = (c * lax.rsqrt(var + eps)) * g_ref[...] + b_ref[...]


def add_layernorm(x2d, r2d, gamma, beta, eps=1e-5):
    M, D = x2d.shape
    tm = _pick_tile(M, 512, 8)
    return pl.pallas_call(
        partial(_add_ln_kernel, eps=eps),
        out_shape=jax.ShapeDtypeStruct((M, D), x2d.dtype),
        grid=(M // tm,),
        in_specs=[
            pl.BlockSpec((tm, D), lambda i: (i, 0)),
            pl.BlockSpec((tm, D), lambda i: (i, 0)),
            pl.BlockSpec((1, D), lambda i: (0, 0)),
            pl.BlockSpec((1, D), lambda i: (0, 0)),
        ],
        out_specs=pl.BlockSpec((tm, D), lambda i: (i, 0)),
        compiler_params=pltpu.CompilerParams(dimension_semantics=("parallel",)),
    )(x2d, r2d, gamma.reshape(1, D), beta.reshape(1, D))


# ------------------------------------------------- model assembly

def encoder_layer(x: jnp.ndarray, p: dict, nhead: int) -> jnp.ndarray:
    B, S, D = x.shape
    H, hd = nhead, D // nhead
    x2d = x.reshape(B * S, D)

    qkv = linear(x2d, p["w_qkv"], p["b_qkv"])                  # [B*S, 3D]
    qkv = qkv.reshape(B, S, 3, H, hd)
    q = jnp.transpose(qkv[:, :, 0], (0, 2, 1, 3))              # [B, H, S, hd]
    k = jnp.transpose(qkv[:, :, 1], (0, 2, 1, 3))
    v = jnp.transpose(qkv[:, :, 2], (0, 2, 1, 3))

    attn = attention(q, k, v)                                  # [B, H, S, hd]
    attn2d = jnp.transpose(attn, (0, 2, 1, 3)).reshape(B * S, D)
    sa = linear(attn2d, p["w_out"], p["b_out"])                # self-attention block out

    x2d = add_layernorm(x2d, sa, p["ln1_g"], p["ln1_b"])       # x = norm1(x + sa)

    ff = linear(x2d, p["w_ff1"], p["b_ff1"], activation="gelu")
    ff = linear(ff, p["w_ff2"], p["b_ff2"])
    x2d = add_layernorm(x2d, ff, p["ln2_g"], p["ln2_b"])       # x = norm2(x + ff)
    return x2d.reshape(B, S, D)


def transformer_model_forward(src: jnp.ndarray, params: dict) -> jnp.ndarray:
    """src: [B, S] int tokens -> [B, S, d_model]."""
    D, H = params["d_model"], params["nhead"]
    # TODO(synk): data-dependent embedding gather left to XLA (jnp.take); scale is fused below.
    emb = jnp.take(params["emb"], src, axis=0)                 # [B, S, D]
    pe3 = params["pe"][: src.shape[0]]                         # [B, 1, D]  (faithful pe[:B] quirk)
    x = scale_add_pe(emb, pe3, math.sqrt(D))                   # fused scale + PE add kernel
    for layer in params["layers"]:
        x = encoder_layer(x, layer, H)
    return x


def init_params(key, *, ntoken, d_model, nhead, d_hid, nlayers):
    keys = jax.random.split(key, 1 + nlayers)
    emb = jax.random.uniform(keys[0], (ntoken, d_model), jnp.float32, -0.1, 0.1)
    layers = []
    for li in range(nlayers):
        lk = jax.random.split(keys[1 + li], 4)
        s = 0.02
        layers.append(dict(
            w_qkv=jax.random.normal(lk[0], (d_model, 3 * d_model), jnp.float32) * s,
            b_qkv=jnp.zeros((3 * d_model,), jnp.float32),
            w_out=jax.random.normal(lk[1], (d_model, d_model), jnp.float32) * s,
            b_out=jnp.zeros((d_model,), jnp.float32),
            w_ff1=jax.random.normal(lk[2], (d_model, d_hid), jnp.float32) * s,
            b_ff1=jnp.zeros((d_hid,), jnp.float32),
            w_ff2=jax.random.normal(lk[3], (d_hid, d_model), jnp.float32) * s,
            b_ff2=jnp.zeros((d_model,), jnp.float32),
            ln1_g=jnp.ones((d_model,), jnp.float32),
            ln1_b=jnp.zeros((d_model,), jnp.float32),
            ln2_g=jnp.ones((d_model,), jnp.float32),
            ln2_b=jnp.zeros((d_model,), jnp.float32),
        ))
    return dict(emb=emb, pe=make_positional_encoding(d_model), layers=layers,
                d_model=d_model, nhead=nhead)


# ------------------------------------------------- pure-JAX reference (same math, no Pallas)

def _ref_ln(h, g, b, eps=1e-5):
    mu = jnp.mean(h, axis=-1, keepdims=True)
    var = jnp.mean((h - mu) ** 2, axis=-1, keepdims=True)
    return (h - mu) * lax.rsqrt(var + eps) * g + b


def _ref_forward(src, params):
    D, H = params["d_model"], params["nhead"]
    hd = D // H
    x = jnp.take(params["emb"], src, axis=0) * math.sqrt(D)
    x = x + params["pe"][: src.shape[0]]                        # broadcast over seq (the quirk)
    B, S, _ = x.shape
    for p in params["layers"]:
        x2 = x.reshape(B * S, D)
        qkv = (x2 @ p["w_qkv"] + p["b_qkv"]).reshape(B, S, 3, H, hd)
        q = jnp.transpose(qkv[:, :, 0], (0, 2, 1, 3))
        k = jnp.transpose(qkv[:, :, 1], (0, 2, 1, 3))
        v = jnp.transpose(qkv[:, :, 2], (0, 2, 1, 3))
        s = jnp.einsum("bhqd,bhkd->bhqk", q, k) / math.sqrt(hd)
        a = jax.nn.softmax(s, axis=-1)
        o = jnp.einsum("bhqk,bhkd->bhqd", a, v)
        o = jnp.transpose(o, (0, 2, 1, 3)).reshape(B * S, D)
        sa = o @ p["w_out"] + p["b_out"]
        h = _ref_ln(x2 + sa, p["ln1_g"], p["ln1_b"])
        ff = jax.nn.gelu(h @ p["w_ff1"] + p["b_ff1"], approximate=True) @ p["w_ff2"] + p["b_ff2"]
        x = _ref_ln(h + ff, p["ln2_g"], p["ln2_b"]).reshape(B, S, D)
    return x


# ------------------------------------------------- demo / self-check

if __name__ == "__main__":
    B, S = 2, 8
    ntoken, d_model, nhead, d_hid, nlayers = 100, 128, 4, 256, 2

    root = jax.random.PRNGKey(0)
    k_tok, k_par = jax.random.split(root)
    src = jax.random.randint(k_tok, (B, S), 0, ntoken, dtype=jnp.int32)
    params = init_params(k_par, ntoken=ntoken, d_model=d_model, nhead=nhead,
                         d_hid=d_hid, nlayers=nlayers)

    # --- tight check of the fused scale + PE-add kernel (the reviewed op) ---
    emb = jnp.take(params["emb"], src, axis=0)
    pe_out = jax.block_until_ready(scale_add_pe(emb, params["pe"][:B], math.sqrt(d_model)))
    pe_ref = emb * math.sqrt(d_model) + params["pe"][:B]
    assert pe_out.shape == (B, S, d_model)
    assert jnp.allclose(pe_out, pe_ref, atol=1e-5), "scale+PE kernel mismatch"

    # --- full TransformerModel forward through the Pallas kernels ---
    out = jax.block_until_ready(transformer_model_forward(src, params))
    assert out.shape == (B, S, d_model)
    assert bool(jnp.all(jnp.isfinite(out)))

    ref = _ref_forward(src, params)
    assert jnp.allclose(out, ref, atol=5e-2, rtol=5e-2), "model output mismatch vs JAX reference"

    print("KERNEL_OK")
</pallas_src>

<mosaic_0001>
module attributes {stable_mosaic.version = 11 : i64} {
  func.func @_scale_pe_kernel(%arg0: i32, %arg1: i32, %arg2: memref<1x8x128xf32, #tpu.memory_space<vmem>>, %arg3: memref<1x1x128xf32, #tpu.memory_space<vmem>>, %arg4: memref<1x8x128xf32, #tpu.memory_space<vmem>>) attributes {dimension_semantics = [#tpu.dimension_semantics<parallel>, #tpu.dimension_semantics<parallel>], iteration_bounds = array<i64: 2, 1>, scalar_prefetch = 0 : i64, scratch_operands = 0 : i64, tpu.core_type = #tpu.core_type<tc>, window_params = [{transform_indices = @transform_0, window_bounds = array<i64: 1, 8, 128>}, {transform_indices = @transform_1, window_bounds = array<i64: 1, 1, 128>}, {transform_indices = @transform_2, window_bounds = array<i64: 1, 8, 128>}]} {
    %c0 = arith.constant 0 : index
    %c0_0 = arith.constant 0 : index
    %c0_1 = arith.constant 0 : index
    %0 = vector.load %arg2[%c0, %c0_0, %c0_1] : memref<1x8x128xf32, #tpu.memory_space<vmem>>, vector<1x8x128xf32>
    %1 = vector.shape_cast %0 : vector<1x8x128xf32> to vector<8x128xf32>
    %cst = arith.constant 11.3137083 : f32
    %2 = vector.broadcast %cst : f32 to vector<8x128xf32>
    %3 = arith.mulf %1, %2 : vector<8x128xf32>
    %c0_2 = arith.constant 0 : index
    %c0_3 = arith.constant 0 : index
    %c0_4 = arith.constant 0 : index
    %4 = vector.load %arg3[%c0_2, %c0_3, %c0_4] : memref<1x1x128xf32, #tpu.memory_space<vmem>>, vector<1x1x128xf32>
    %5 = vector.shape_cast %4 : vector<1x1x128xf32> to vector<1x128xf32>
    %6 = vector.broadcast %5 : vector<1x128xf32> to vector<8x128xf32>
    %7 = arith.addf %3, %6 : vector<8x128xf32>
    %c0_5 = arith.constant 0 : index
    %c0_6 = arith.constant 0 : index
    %c0_7 = arith.constant 0 : index
    %8 = vector.load %arg4[%c0_5, %c0_6, %c0_7] : memref<1x8x128xf32, #tpu.memory_space<vmem>>, vector<1x8x128xf32>
    %9 = vector.shape_cast %8 : vector<1x8x128xf32> to vector<8x128xf32>
    %10 = vector.shape_cast %7 : vector<8x128xf32> to vector<1x8x128xf32>
    tpu.vector_store %arg4[%c0_5, %c0_6, %c0_7], %10 {strides = array<i32>} : memref<1x8x128xf32, #tpu.memory_space<vmem>>, vector<1x8x128xf32>,
    return
  }
  func.func @transform_0(%arg0: i32, %arg1: i32) -> (i32, i32, i32) {
    %c0_i32 = arith.constant 0 : i32
    %c0_i32_0 = arith.constant 0 : i32
    return %arg0, %arg1, %c0_i32 : i32, i32, i32
  }
  func.func @transform_1(%arg0: i32, %arg1: i32) -> (i32, i32, i32) {
    %c0_i32 = arith.constant 0 : i32
    %c0_i32_0 = arith.constant 0 : i32
    %c0_i32_1 = arith.constant 0 : i32
    return %arg0, %c0_i32, %c0_i32_0 : i32, i32, i32
  }
  func.func @transform_2(%arg0: i32, %arg1: i32) -> (i32, i32, i32) {
    %c0_i32 = arith.constant 0 : i32
    %c0_i32_0 = arith.constant 0 : i32
    return %arg0, %arg1, %c0_i32 : i32, i32, i32
  }
}

</mosaic_0001>

<llo_original>
// kernel: tpu_custom_call.1
$region0: #{tpu_custom_call.1}
  #allocation0 [shape = 'u32[]', space=smem, size = 0x4, offset = 0x4, fixed_abs, tag = 'smem constant byte address 0x4 - core index']
  #allocation1 [shape = 'u32[144,128]{1,0:T(1,128)}', space=vmem, size = 0x12000, scoped, tag = 'internal scratch']
  %s0 = inlined_call_operand.hbm [shape: f32[2,8,128], index: 0, kind: input, shape index: {}]
  %s1 = inlined_call_operand.vmem [shape: f32[2,1,128], index: 1, kind: input, shape index: {}]
  %s2 = inlined_call_operand.hbm [shape: f32[2,8,128], index: 2, kind: output, shape index: {}]
  %s3 = sld [smem:[#allocation0]]
  $region45: #{tpu_custom_call.1} parent=0
    _
  %s5 = ssub.s32 1, %s3
  %s6 = scalar_select 0, %s5, %s3
  $region1: #{tpu_custom_call.1} parent=0
    #allocation2 [shape = 'u8[8192]{0}', space=vmem, size = 0x2000, scoped, tag = 'input window, operand 0']
    #allocation3 [shape = 's32[2]{0}', space=sflag, size = 0x8, scoped, tag = 'scoped memory for tpu_custom_call.1']
    #allocation4 [shape = 's32[2]{0}', space=sflag, size = 0x8, scoped, tag = 'scoped memory for tpu_custom_call.1']
    #allocation5 [shape = 'u8[8192]{0}', space=vmem, size = 0x2000, scoped, tag = 'output window, operand 0']
    %7 = vsyncpa [#allocation3], 0
    %s8 = scalar_lea.sflag [#allocation3], 1
    %9 = vsyncpa %s8, 0
    %10 = vsyncpa [#allocation4], 0
    %s11 = scalar_lea.sflag [#allocation4], 1
    %12 = vsyncpa %s11, 0
    loop: start=0, step=1, limit=4
    $region2: #{tpu_custom_call.1} parent=1 // loop_pre_header
      _
    $region3: #{tpu_custom_call.1} parent=1 // loop_header
      %s14 = sphi 0, %s18
      %p15 = scmp.ge.s32.totalorder %s14, 4
      %s21 = sphi 0, %s33
      %s22 = sphi 0, %s29
      %s23 = sphi 0, %s21
      %s24 = sphi 0, %s22
      %s25 = sphi 0, %s23
      %s26 = sphi 0, %s24
      %s38 = sphi 0, %s40
      %s41 = sphi 0, %s38
      %s42 = sphi 0, %s41
      %s58 = sphi 0, %s42
      %s64 = sphi 0, %s66
      %s67 = sphi 0, %s64
      %s68 = sphi 0, %s67
      %s84 = sphi 0, %s68
      %s92 = sphi 0, %s94
      %s95 = sphi 0, %s92
      %s96 = sphi 0, %s95
      %s112 = sphi 0, %s96
    $region4: #{tpu_custom_call.1} parent=1 // loop_header_branch
      %17 = sbr.rel (%p15) target = $region8
    $region5: #{tpu_custom_call.1} parent=1 // loop_body
      %s19 = ssub.s32 %s14, 1
      %s20 = ssub.s32 %s14, 2
      %s27 = sadd.s32 1, %s22
      %p28 = scmp.ge.s32.totalorder %s27, 1
      %s29 = scalar_select %p28, 0, %s27
      %s30 = sadd.s32 1, %s21
      %s31 = scalar_select %p28, %s30, %s21
      %p32 = scmp.ge.s32.totalorder %s31, 2
      %s33 = scalar_select %p32, 0, %s31
      %s34 = ssub.s32 %s21, %s33
      %s35 = ssub.s32 %s22, %s29
      %s36 = sor.u32 %s34, %s35
      %p37 = scmp.eq.s32.totalorder %s36, 0
      %s39 = sadd.s32 %s38, 1
      %s40 = scalar_select %p37, %s38, %s39
      %p43 = pneg %p37
      %p44 = scmp.eq.s32.totalorder %s14, 1
      %p45 = por %p43, %p44
      %p46 = scmp.ne.s32.totalorder %s38, %s41
      %p47 = scmp.eq.s32.totalorder %s14, 0
      %p48 = por %p46, %p47
      %p49 = scmp.ne.s32.totalorder %s38, %s41
      %p50 = scmp.eq.s32.totalorder %s19, 1
      %p51 = por %p49, %p50
      %p52 = scmp.ne.s32.totalorder %s41, %s42
      %p53 = scmp.eq.s32.totalorder %s19, 0
      %p54 = por %p52, %p53
      %p55 = scmp.ne.s32.totalorder %s41, %s42
      %p56 = scmp.eq.s32.totalorder %s20, 1
      %p57 = por %p55, %p56
      %p59 = scmp.ne.s32.totalorder %s42, %s58
      %p60 = scmp.eq.s32.totalorder %s20, 0
      %p61 = por %p59, %p60
      %s62 = ssub.s32 %s21, %s33
      %p63 = scmp.eq.s32.totalorder %s62, 0
      %s65 = sadd.s32 %s64, 1
      %s66 = scalar_select %p63, %s64, %s65
      %p69 = pneg %p63
      %p70 = scmp.eq.s32.totalorder %s14, 1
      %p71 = por %p69, %p70
      %p72 = scmp.ne.s32.totalorder %s64, %s67
      %p73 = scmp.eq.s32.totalorder %s14, 0
      %p74 = por %p72, %p73
      %p75 = scmp.ne.s32.totalorder %s64, %s67
      %p76 = scmp.eq.s32.totalorder %s19, 1
      %p77 = por %p75, %p76
      %p78 = scmp.ne.s32.totalorder %s67, %s68
      %p79 = scmp.eq.s32.totalorder %s19, 0
      %p80 = por %p78, %p79
      %p81 = scmp.ne.s32.totalorder %s67, %s68
      %p82 = scmp.eq.s32.totalorder %s20, 1
      %p83 = por %p81, %p82
      %p85 = scmp.ne.s32.totalorder %s68, %s84
      %p86 = scmp.eq.s32.totalorder %s20, 0
      %p87 = por %p85, %p86
      %s88 = ssub.s32 %s21, %s33
      %s89 = ssub.s32 %s22, %s29
      %s90 = sor.u32 %s88, %s89
      %p91 = scmp.eq.s32.totalorder %s90, 0
      %s93 = sadd.s32 %s92, 1
      %s94 = scalar_select %p91, %s92, %s93
      %p97 = pneg %p91
      %p98 = scmp.eq.s32.totalorder %s14, 1
      %p99 = por %p97, %p98
      %p100 = scmp.ne.s32.totalorder %s92, %s95
      %p101 = scmp.eq.s32.totalorder %s14, 0
      %p102 = por %p100, %p101
      %p103 = scmp.ne.s32.totalorder %s92, %s95
      %p104 = scmp.eq.s32.totalorder %s19, 1
      %p105 = por %p103, %p104
      %p106 = scmp.ne.s32.totalorder %s95, %s96
      %p107 = scmp.eq.s32.totalorder %s19, 0
      %p108 = por %p106, %p107
      %p109 = scmp.ne.s32.totalorder %s95, %s96
      %p110 = scmp.eq.s32.totalorder %s20, 1
      %p111 = por %p109, %p110
      %p113 = scmp.ne.s32.totalorder %s96, %s112
      %p114 = scmp.eq.s32.totalorder %s20, 0
      %p115 = por %p113, %p114
      %p116 = scmp.le.s32.totalorder 1, %s14
      %p117 = scmp.lt.s32.totalorder %s14, 3
      %p118 = pnand %p116, %p117
      %p119 = pneg %p118
      // Predicated region
      $region9: #{tpu_custom_call.1} parent=5 // pred_check
        _
      $region10: #{tpu_custom_call.1} parent=5 // pred_check_branch
        %121 = sbr.rel (%p118) target = $region12
      $region11: #{tpu_custom_call.1} parent=5 // pred_region
        %s122 = ssub.s32 %s14, 1
      $region12: #{tpu_custom_call.1} parent=5 // pred_fallthru
        _
      %p123 = scmp.lt.s32.totalorder %s14, 2
      // Predicated region
      $region13: #{tpu_custom_call.1} parent=5 // pred_check
        %p124 = pneg %p123
      $region14: #{tpu_custom_call.1} parent=5 // pred_check_branch
        %126 = sbr.rel (%p124) target = $region16
      $region15: #{tpu_custom_call.1} parent=5 // pred_region
        // Predicated region
        $region17: #{tpu_custom_call.1} parent=15 // pred_check
          %p127 = pneg %p48
        $region18: #{tpu_custom_call.1} parent=15 // pred_check_branch
          %129 = sbr.rel (%p127) target = $region20
        $region19: #{tpu_custom_call.1} parent=15 // pred_region
          %s130 = sand.u32 %s38, 1
          %s131 = scalar_lea.sflag [#allocation3], %s130
          %s132 = sand.u32 %s38, 1
          %s133 = smul.addr %s132, 8
          %s134 = scalar_lea.vmem [#allocation2], %s133
          %s136 = ssub.s32 128, 128
          %137 = vsyncadd %s131, %s136
          %s138 = sadd.s32 %s22, %s21
          %s139 = smul.addr %s138, 128
          %s140 = scalar_lea.hbm %s0, %s139
          %s142 = sshll.u32 %s134, 4
          %s143 = int_to_ptr.vmem [resolvable:$true] %s142
          %145 = dma.hbm_to_vmem [thread:$0]  %s140, 128, %s143, %s131
        $region20: #{tpu_custom_call.1} parent=15 // pred_fallthru
          _
        // Predicated region
        $region21: #{tpu_custom_call.1} parent=15 // pred_check
          %p146 = pneg %p74
        $region22: #{tpu_custom_call.1} parent=15 // pred_check_branch
          %148 = sbr.rel (%p146) target = $region24
        $region23: #{tpu_custom_call.1} parent=15 // pred_region
          %p149 = scmp.lt.s32.totalorder %s21, 1
          %s150 = scalar_select %p149, %s21, 1
          %s151 = scalar_lea.vmem %s1, %s150
        $region24: #{tpu_custom_call.1} parent=15 // pred_fallthru
          _
      $region16: #{tpu_custom_call.1} parent=5 // pred_fallthru
        _
      %p152 = scmp.le.s32.totalorder 1, %s14
      %p153 = scmp.lt.s32.totalorder %s14, 3
      %p154 = pnand %p152, %p153
      %p155 = pneg %p154
      // Predicated region
      $region25: #{tpu_custom_call.1} parent=5 // pred_check
        _
      $region26: #{tpu_custom_call.1} parent=5 // pred_check_branch
        %157 = sbr.rel (%p154) target = $region28
      $region27: #{tpu_custom_call.1} parent=5 // pred_region
        %s158 = ssub.s32 %s14, 1
        %s159 = sand.u32 %s41, 1
        %s160 = scalar_lea.sflag [#allocation3], %s159
        %s161 = sand.u32 %s41, 1
        %s162 = smul.addr %s161, 8
        %s163 = scalar_lea.vmem [#allocation2], %s162
        // Predicated region
        $region29: #{tpu_custom_call.1} parent=27 // pred_check
          %p164 = pneg %p54
        $region30: #{tpu_custom_call.1} parent=27 // pred_check_branch
          %166 = sbr.rel (%p164) target = $region32
        $region31: #{tpu_custom_call.1} parent=27 // pred_region
          %167 = dma.done %s160, 128
        $region32: #{tpu_custom_call.1} parent=27 // pred_fallthru
          _
        %s168 = sand.u32 %s41, 1
        %s169 = scalar_lea.sflag [#allocation3], %s168
        %s170 = sand.u32 %s41, 1
        %s171 = smul.addr %s170, 8
        %s172 = scalar_lea.vmem [#allocation2], %s171
        %p173 = pneg %p54
        %p174 = pneg %p51
        %p175 = scmp.lt.s32.totalorder %s23, 1
        %s176 = scalar_select %p175, %s23, 1
        %s177 = scalar_lea.vmem %s1, %s176
        %p178 = pneg %p80
        %p179 = pneg %p77
        %p180 = pneg %p108
        %p181 = pneg %p105
        %s182 = sand.u32 %s95, 1
        %s183 = scalar_lea.sflag [#allocation4], %s182
        %s184 = sand.u32 %s95, 1
        %s185 = smul.addr %s184, 8
        %s186 = scalar_lea.vmem [#allocation5], %s185
        %p187 = scmp.lt.s32.totalorder %s23, 1
        %s188 = scalar_select %p187, %s23, 1
        %s189 = scalar_lea.vmem %s1, %s188
        %v190 = vld [vmem:[%s163] sm:$0xff]
        %v191 = vmul.f32 %v190, 11.313708
        %v192 = vld [vmem:[%s189] sm:$0x1]
        %v194 = vlaneseq
        %v195 = vshrl.u32 %v194, 7
        %v196 = vsub.s32 0, %v195
        %v197 = vrot.slane %v192, %v196
        %v199 = vadd.f32 %v191, %v197
        %200 = vst [vmem:[%s186] sm:$0xff] %v199
        %s201 = sand.u32 %s95, 1
        %s202 = scalar_lea.sflag [#allocation4], %s201
        %s203 = sand.u32 %s95, 1
        %s204 = smul.addr %s203, 8
        %s205 = scalar_lea.vmem [#allocation5], %s204
        // Predicated region
        $region33: #{tpu_custom_call.1} parent=27 // pred_check
          %p206 = pneg %p105
        $region34: #{tpu_custom_call.1} parent=27 // pred_check_branch
          %208 = sbr.rel (%p206) target = $region36
        $region35: #{tpu_custom_call.1} parent=27 // pred_region
          %s210 = ssub.s32 128, 128
          %211 = vsyncadd %s202, %s210
          %s212 = sadd.s32 %s24, %s23
          %s213 = smul.addr %s212, 128
          %s214 = scalar_lea.hbm %s2, %s213
          %s216 = sshll.u32 %s205, 4
          %s217 = int_to_ptr.vmem [resolvable:$true] %s216
          %219 = dma.vmem_to_hbm [thread:$0]  %s217, 128, %s214, %s202
        $region36: #{tpu_custom_call.1} parent=27 // pred_fallthru
          _
      $region28: #{tpu_custom_call.1} parent=5 // pred_fallthru
        _
      %p220 = scmp.le.s32.totalorder 2, %s14
      // Predicated region
      $region37: #{tpu_custom_call.1} parent=5 // pred_check
        %p221 = pneg %p220
      $region38: #{tpu_custom_call.1} parent=5 // pred_check_branch
        %223 = sbr.rel (%p221) target = $region40
      $region39: #{tpu_custom_call.1} parent=5 // pred_region
        %s224 = ssub.s32 %s14, 2
        // Predicated region
        $region41: #{tpu_custom_call.1} parent=39 // pred_check
          %p225 = pneg %p111
        $region42: #{tpu_custom_call.1} parent=39 // pred_check_branch
          %227 = sbr.rel (%p225) target = $region44
        $region43: #{tpu_custom_call.1} parent=39 // pred_region
          %s228 = sand.u32 %s96, 1
          %s229 = scalar_lea.sflag [#allocation4], %s228
          %s230 = sand.u32 %s96, 1
          %s231 = smul.addr %s230, 8
          %s232 = scalar_lea.vmem [#allocation5], %s231
          %233 = dma.done %s229, 128
        $region44: #{tpu_custom_call.1} parent=39 // pred_fallthru
          _
      $region40: #{tpu_custom_call.1} parent=5 // pred_fallthru
        _
    $region6: #{tpu_custom_call.1} parent=1 // loop_footer
      %s18 = sadd.s32 1, %s14
    $region7: #{tpu_custom_call.1} parent=1 // loop_footer_branch
      %13 = sbr.rel target = $region3
    $region8: #{tpu_custom_call.1} parent=1 // loop_exit
      _
    %234 = vsyncpa [#allocation3], 1
    %s235 = scalar_lea.sflag [#allocation3], 1
    %236 = vsyncpa %s235, 1
    %237 = vsyncpa [#allocation4], 1
    %s238 = scalar_lea.sflag [#allocation4], 1
    %239 = vsyncpa %s238, 1

</llo_original>
